<compile_context>
chip_gen: v7x
topology: tpu7x:2x2x1
jax: 0.10.0
libtpu: 0.0.40
codegen_flags: <defaults>
</compile_context>

<pallas_src>
import jax
import jax.numpy as jnp
from jax import lax
from jax.experimental import pallas as pl
from jax.experimental.pallas import tpu as pltpu


def _round_up(x, m):
    return ((x + m - 1) // m) * m


def _mlp_kernel(x_ref, w1_ref, b1_ref, w2_ref, b2_ref, w3_ref, b3_ref, o_ref):
    # x_ref : (TILE_B, D) f32   -- original batch-major layout, contiguous in HBM
    # w1_ref: (64, D), w2_ref: (32, 64)   -- compute dtype (f32 or bf16)
    # b1_ref: (64, 1) compute dtype; b2_ref: (32, 1), w3_ref: (32, 1) f32
    # b3_ref: (1, 1) f32 scalar in SMEM
    # o_ref : (1, TILE_B) f32   -- lane-dense output block
    xc = x_ref[...].astype(w1_ref.dtype)   # in-kernel cast; rides idle VPU slots

    # fc1: contract the feature (minor) dim of both operands on the MXU:
    # (64, D) x (TILE_B, D) -> (64, TILE_B), f32 accumulation.
    h1 = lax.dot_general(
        w1_ref[...], xc,
        dimension_numbers=(((1,), (1,)), ((), ())),
        preferred_element_type=jnp.float32)
    # bias + ReLU in the elementwise dtype (bf16 on the v6e/v7x path, else f32).
    h1 = jnp.maximum(h1.astype(b1_ref.dtype) + b1_ref[...], 0).astype(w2_ref.dtype)

    # fc2: (32, 64) @ (64, TILE_B) -> (32, TILE_B), f32 accumulation.
    h2 = jnp.dot(w2_ref[...], h1, preferred_element_type=jnp.float32)
    h2 = jnp.maximum(h2 + b2_ref[...], 0.0)

    # fc3 (32 -> 1): VPU multiply + sublane reduce (XLU) instead of an N=1 matmul.
    out = jnp.sum(h2 * w3_ref[...], axis=0, keepdims=True) + b3_ref[0, 0]
    o_ref[...] = out.astype(o_ref.dtype)


def calorie_model_forward(x, params, *, compute_dtype=jnp.float32, max_tile=16384):
    """Fused MLP forward. x: (B, input_dim) f32 -> (B,) f32.

    compute_dtype=jnp.bfloat16 is the recommended path on v6e/v7x (MXU accumulation
    stays f32); f32 everywhere is the conservative default (v5e has no bf16 VALU).
    """
    w1, b1, w2, b2, w3, b3 = params
    B, D = x.shape
    H1, H2 = w1.shape[0], w2.shape[0]

    elem_bytes = jnp.dtype(compute_dtype).itemsize
    d_pad = _round_up(D, 128)

    # Conservative per-batch-lane VMEM estimate (bytes) for tile sizing.
    bytes_per_lane = (
        2 * d_pad * 4                 # double-buffered x block (lanes padded to 128)
        + D * (4 + elem_bytes)        # loaded x + in-kernel cast
        + H1 * (4 + 2 * elem_bytes)   # h1 f32 accumulator + elementwise copies
        + H2 * 4 * 3                  # h2 + temporaries
        + 2 * 8 * 4                   # double-buffered (1, tile) output (sublane padded)
    )
    vmem_data_budget = 32 * 1024 * 1024            # leave headroom under the 48 MiB limit
    tile_cap = max(128, (vmem_data_budget // bytes_per_lane) // 128 * 128)
    max_tile = max(128, _round_up(max_tile, 128))

    # Keep >= 2 tiles whenever the batch allows it so v7x can shard the grid
    # over both TensorCores; otherwise use the biggest tile that fits VMEM.
    tile = min(max_tile, tile_cap, _round_up(pl.cdiv(B, 2), 128))
    num_tiles = pl.cdiv(B, tile)
    if num_tiles > 1 and num_tiles % 2 == 1:
        # Best-effort even tile count for megacore load balance (never grows tile).
        tile = min(tile, _round_up(pl.cdiv(B, num_tiles + 1), 128))
        num_tiles = pl.cdiv(B, tile)
    b_pad = num_tiles * tile

    # Weights/biases are tiny; cast once in the wrapper. x stays f32 in HBM.
    w1c = w1.astype(compute_dtype)
    w2c = w2.astype(compute_dtype)
    b1c = b1.astype(compute_dtype)   # bf16 h1 bias/ReLU chain on the bf16 path

    out = pl.pallas_call(
        _mlp_kernel,
        out_shape=jax.ShapeDtypeStruct((1, b_pad), jnp.float32),
        grid=(num_tiles,),
        in_specs=[
            pl.BlockSpec((tile, D), lambda i: (i, 0)),          # contiguous x tile
            pl.BlockSpec(w1c.shape, lambda i: (0, 0)),          # resident weights
            pl.BlockSpec(b1c.shape, lambda i: (0, 0)),
            pl.BlockSpec(w2c.shape, lambda i: (0, 0)),
            pl.BlockSpec(b2.shape, lambda i: (0, 0)),
            pl.BlockSpec(w3.shape, lambda i: (0, 0)),
            pl.BlockSpec(memory_space=pltpu.MemorySpace.SMEM),  # b3 scalar in SMEM
        ],
        out_specs=pl.BlockSpec((1, tile), lambda i: (0, i)),    # lane-dense output
        compiler_params=pltpu.CompilerParams(
            dimension_semantics=("parallel",),                  # v7x: both TCs
            vmem_limit_bytes=48 * 1024 * 1024,                  # v5e/v6e: raise scoped VMEM
        ),
    )(x, w1c, b1c, w2c, b2, w3, b3)

    # PyTorch: return x.squeeze() -> (B,). Drop the padded columns.
    return out.reshape(-1)[:B]


def init_params(key, input_dim):
    """PyTorch-style U(-1/sqrt(fan_in), 1/sqrt(fan_in)) init, stored in kernel layout."""
    def linear_init(k, fan_in, fan_out):
        k_w, k_b = jax.random.split(k)
        bound = 1.0 / jnp.sqrt(fan_in)
        w = jax.random.uniform(k_w, (fan_out, fan_in), jnp.float32, -bound, bound)
        b = jax.random.uniform(k_b, (fan_out, 1), jnp.float32, -bound, bound)
        return w, b

    k1, k2, k3 = jax.random.split(key, 3)
    w1, b1 = linear_init(k1, input_dim, 64)   # (64, D), (64, 1)
    w2, b2 = linear_init(k2, 64, 32)          # (32, 64), (32, 1)
    w3, b3 = linear_init(k3, 32, 1)           # (1, 32), (1, 1)
    # Kernel wants fc3 weight as a (32, 1) column and b3 as a (1, 1) SMEM scalar.
    return (w1, b1, w2, b2, w3.reshape(32, 1), b3.reshape(1, 1))


def reference_forward(x, params):
    """Plain-JAX f32 reference matching the PyTorch module."""
    w1, b1, w2, b2, w3, b3 = params
    h = jnp.maximum(x @ w1.T + b1.reshape(1, -1), 0.0)
    h = jnp.maximum(h @ w2.T + b2.reshape(1, -1), 0.0)
    o = h @ w3 + b3[0, 0]                     # (B, 1)
    return jnp.squeeze(o, axis=-1)


if __name__ == "__main__":
    key = jax.random.PRNGKey(0)
    k_params, k_x, k_x2 = jax.random.split(key, 3)

    input_dim = 16
    params = init_params(k_params, input_dim)

    # 1) Small-batch f32 path (tight tolerance); B=8 not a multiple of the tile
    #    exercises the ragged trailing block (no wrapper-side padding).
    x = jax.random.normal(k_x, (8, input_dim), dtype=jnp.float32)
    out = jax.block_until_ready(calorie_model_forward(x, params))
    ref = reference_forward(x, params)
    assert out.shape == (8,), f"bad output shape {out.shape}"
    assert jnp.allclose(out, ref, atol=1e-4, rtol=1e-4), "f32 mismatch vs reference"

    # 2) bf16 compute path (recommended on v6e/v7x); f32 accumulation, loose tolerance.
    out_bf16 = jax.block_until_ready(
        calorie_model_forward(x, params, compute_dtype=jnp.bfloat16))
    assert jnp.allclose(out_bf16, ref, atol=1e-1, rtol=1e-1), "bf16 mismatch vs reference"

    # 3) Multi-tile path: batch not a multiple of the tile (600 rows, forced 256-lane tiles).
    x2 = jax.random.normal(k_x2, (600, input_dim), dtype=jnp.float32)
    out2 = jax.block_until_ready(calorie_model_forward(x2, params, max_tile=256))
    ref2 = reference_forward(x2, params)
    assert out2.shape == (600,), f"bad output shape {out2.shape}"
    assert jnp.allclose(out2, ref2, atol=1e-4, rtol=1e-4), "multi-tile mismatch vs reference"

    print("KERNEL_OK")
</pallas_src>

<mosaic_0001>
module attributes {stable_mosaic.version = 11 : i64} {
  func.func @_mlp_kernel(%arg0: i32, %arg1: memref<128x16xf32, #tpu.memory_space<vmem>>, %arg2: memref<64x16xf32, #tpu.memory_space<vmem>>, %arg3: memref<64x1xf32, #tpu.memory_space<vmem>>, %arg4: memref<32x64xf32, #tpu.memory_space<vmem>>, %arg5: memref<32x1xf32, #tpu.memory_space<vmem>>, %arg6: memref<32x1xf32, #tpu.memory_space<vmem>>, %arg7: memref<1x1xf32, #tpu.memory_space<smem>>, %arg8: memref<1x128xf32, #tpu.memory_space<vmem>>) attributes {dimension_semantics = [#tpu.dimension_semantics<parallel>], iteration_bounds = array<i64: 1>, scalar_prefetch = 0 : i64, scratch_operands = 0 : i64, tpu.core_type = #tpu.core_type<tc>, window_params = [{transform_indices = @transform_0, window_bounds = array<i64: 128, 16>}, {pipeline_mode = #tpu.pipeline_mode<synchronous>, transform_indices = @transform_1, window_bounds = array<i64: 64, 16>}, {pipeline_mode = #tpu.pipeline_mode<synchronous>, transform_indices = @transform_2, window_bounds = array<i64: 64, 1>}, {pipeline_mode = #tpu.pipeline_mode<synchronous>, transform_indices = @transform_3, window_bounds = array<i64: 32, 64>}, {pipeline_mode = #tpu.pipeline_mode<synchronous>, transform_indices = @transform_4, window_bounds = array<i64: 32, 1>}, {pipeline_mode = #tpu.pipeline_mode<synchronous>, transform_indices = @transform_5, window_bounds = array<i64: 32, 1>}, {transform_indices = @transform_6, window_bounds = array<i64: 1, 1>}, {transform_indices = @transform_7, window_bounds = array<i64: 1, 128>}]} {
    %c0 = arith.constant 0 : index
    %c0_0 = arith.constant 0 : index
    %0 = vector.load %arg1[%c0, %c0_0] : memref<128x16xf32, #tpu.memory_space<vmem>>, vector<128x16xf32>
    %c0_1 = arith.constant 0 : index
    %c0_2 = arith.constant 0 : index
    %1 = vector.load %arg2[%c0_1, %c0_2] : memref<64x16xf32, #tpu.memory_space<vmem>>, vector<64x16xf32>
    %cst = arith.constant dense<0.000000e+00> : vector<64x128xf32>
    %2 = tpu.matmul %1, %0, %cst {dimension_numbers = #tpu.dot_dimension_numbers<[1], [1], [0], [0], [0, 0, 1, 0], [], []>} : vector<64x16xf32>, vector<128x16xf32>, vector<64x128xf32> -> vector<64x128xf32>
    %c0_3 = arith.constant 0 : index
    %c0_4 = arith.constant 0 : index
    %3 = vector.load %arg3[%c0_3, %c0_4] : memref<64x1xf32, #tpu.memory_space<vmem>>, vector<64x1xf32>
    %4 = vector.broadcast %3 : vector<64x1xf32> to vector<64x128xf32>
    %5 = arith.addf %2, %4 : vector<64x128xf32>
    %cst_5 = arith.constant 0.000000e+00 : f32
    %6 = vector.broadcast %cst_5 : f32 to vector<64x128xf32>
    %7 = arith.maximumf %5, %6 : vector<64x128xf32>
    %c0_6 = arith.constant 0 : index
    %c0_7 = arith.constant 0 : index
    %8 = vector.load %arg4[%c0_6, %c0_7] : memref<32x64xf32, #tpu.memory_space<vmem>>, vector<32x64xf32>
    %cst_8 = arith.constant dense<0.000000e+00> : vector<32x128xf32>
    %9 = tpu.matmul %8, %7, %cst_8 {dimension_numbers = #tpu.dot_dimension_numbers<[1], [0], [0], [1], [0, 0, 1, 1], [], []>} : vector<32x64xf32>, vector<64x128xf32>, vector<32x128xf32> -> vector<32x128xf32>
    %c0_9 = arith.constant 0 : index
    %c0_10 = arith.constant 0 : index
    %10 = vector.load %arg5[%c0_9, %c0_10] : memref<32x1xf32, #tpu.memory_space<vmem>>, vector<32x1xf32>
    %11 = vector.broadcast %10 : vector<32x1xf32> to vector<32x128xf32>
    %12 = arith.addf %9, %11 : vector<32x128xf32>
    %cst_11 = arith.constant 0.000000e+00 : f32
    %13 = vector.broadcast %cst_11 : f32 to vector<32x128xf32>
    %14 = arith.maximumf %12, %13 : vector<32x128xf32>
    %c0_12 = arith.constant 0 : index
    %c0_13 = arith.constant 0 : index
    %15 = vector.load %arg6[%c0_12, %c0_13] : memref<32x1xf32, #tpu.memory_space<vmem>>, vector<32x1xf32>
    %16 = vector.broadcast %15 : vector<32x1xf32> to vector<32x128xf32>
    %17 = arith.mulf %14, %16 : vector<32x128xf32>
    %cst_14 = arith.constant dense<0.000000e+00> : vector<128xf32>
    %18 = vector.multi_reduction <add>, %17, %cst_14 [0] : vector<32x128xf32> to vector<128xf32>
    %19 = vector.shape_cast %18 : vector<128xf32> to vector<1x128xf32>
    %c0_15 = arith.constant 0 : index
    %c0_16 = arith.constant 0 : index
    %20 = memref.load %arg7[%c0_15, %c0_16] : memref<1x1xf32, #tpu.memory_space<smem>>
    %21 = vector.broadcast %20 : f32 to vector<1x128xf32>
    %22 = arith.addf %19, %21 : vector<1x128xf32>
    %c0_17 = arith.constant 0 : index
    %c0_18 = arith.constant 0 : index
    %23 = vector.load %arg8[%c0_17, %c0_18] : memref<1x128xf32, #tpu.memory_space<vmem>>, vector<1x128xf32>
    tpu.vector_store %arg8[%c0_17, %c0_18], %22 {strides = array<i32>} : memref<1x128xf32, #tpu.memory_space<vmem>>, vector<1x128xf32>,
    return
  }
  func.func @transform_0(%arg0: i32) -> (i32, i32) {
    %c0_i32 = arith.constant 0 : i32
    %c0_i32_0 = arith.constant 0 : i32
    return %arg0, %c0_i32 : i32, i32
  }
  func.func @transform_1(%arg0: i32) -> (i32, i32) {
    %c0_i32 = arith.constant 0 : i32
    %c0_i32_0 = arith.constant 0 : i32
    %c0_i32_1 = arith.constant 0 : i32
    return %c0_i32, %c0_i32_0 : i32, i32
  }
  func.func @transform_2(%arg0: i32) -> (i32, i32) {
    %c0_i32 = arith.constant 0 : i32
    %c0_i32_0 = arith.constant 0 : i32
    %c0_i32_1 = arith.constant 0 : i32
    return %c0_i32, %c0_i32_0 : i32, i32
  }
  func.func @transform_3(%arg0: i32) -> (i32, i32) {
    %c0_i32 = arith.constant 0 : i32
    %c0_i32_0 = arith.constant 0 : i32
    %c0_i32_1 = arith.constant 0 : i32
    return %c0_i32, %c0_i32_0 : i32, i32
  }
  func.func @transform_4(%arg0: i32) -> (i32, i32) {
    %c0_i32 = arith.constant 0 : i32
    %c0_i32_0 = arith.constant 0 : i32
    %c0_i32_1 = arith.constant 0 : i32
    return %c0_i32, %c0_i32_0 : i32, i32
  }
  func.func @transform_5(%arg0: i32) -> (i32, i32) {
    %c0_i32 = arith.constant 0 : i32
    %c0_i32_0 = arith.constant 0 : i32
    %c0_i32_1 = arith.constant 0 : i32
    return %c0_i32, %c0_i32_0 : i32, i32
  }
  func.func @transform_6(%arg0: i32) -> (i32, i32) {
    %c0_i32 = arith.constant 0 : i32
    %c0_i32_0 = arith.constant 0 : i32
    %c0_i32_1 = arith.constant 0 : i32
    return %c0_i32, %c0_i32_0 : i32, i32
  }
  func.func @transform_7(%arg0: i32) -> (i32, i32) {
    %c0_i32 = arith.constant 0 : i32
    %c0_i32_0 = arith.constant 0 : i32
    return %c0_i32, %arg0 : i32, i32
  }
}

</mosaic_0001>

<llo_original>
// kernel: tpu_custom_call.1
$region0: #{tpu_custom_call.1}
  #allocation0 [shape = 'u32[]', space=smem, size = 0x4, offset = 0x4, fixed_abs, tag = 'smem constant byte address 0x4 - core index']
  #allocation1 [shape = 'u32[144,128]{1,0:T(1,128)}', space=vmem, size = 0x12000, scoped, tag = 'internal scratch']
  #allocation2 [shape = 'f32[1,1]{1,0:T(1,128)S(6)}', space=smem, size = 0x200, scoped, tag = 'scoped memory for tpu_custom_call.1']
  %s0 = inlined_call_operand.vmem [shape: f32[8,16], index: 0, kind: input, shape index: {}]
  %s1 = inlined_call_operand.vmem [shape: f32[64,16], index: 1, kind: input, shape index: {}]
  %s2 = inlined_call_operand.vmem [shape: f32[64,1], index: 2, kind: input, shape index: {}]
  %s3 = inlined_call_operand.vmem [shape: f32[32,64], index: 3, kind: input, shape index: {}]
  %s4 = inlined_call_operand.vmem [shape: f32[32,1], index: 4, kind: input, shape index: {}]
  %s5 = inlined_call_operand.vmem [shape: f32[32,1], index: 5, kind: input, shape index: {}]
  %s6 = inlined_call_operand.<no memory space> [shape: f32[1,1], index: 6, kind: input, shape index: {}]
  %s7 = inlined_call_operand.hbm [shape: f32[1,128], index: 7, kind: output, shape index: {}]
  %s8 = sld [smem:[#allocation0]]
  $region38: #{tpu_custom_call.1} parent=0
    _
  %s10 = ssub.s32 1, %s8
  %s11 = scalar_select 0, %s10, %s8
  %12 = sst [smem:[#allocation2]] %s6
  $region1: #{tpu_custom_call.1} parent=0
    #allocation3 [shape = 'u8[512]{0}', space=vmem, size = 0x400, scoped, tag = 'output window, operand 0, single buffered']
    #allocation4 [shape = 's32[1]{0}', space=sflag, size = 0x4, scoped, tag = 'scoped memory for tpu_custom_call.1']
    %13 = vsyncpa [#allocation4], 0
    // Predicated region
    $region2: #{tpu_custom_call.1} parent=1 // pred_check
      _
    $region3: #{tpu_custom_call.1} parent=1 // pred_check_branch
      %15 = sbr.rel (0) target = $region5
    $region4: #{tpu_custom_call.1} parent=1 // pred_region
      _
    $region5: #{tpu_custom_call.1} parent=1 // pred_fallthru
      _
    // Predicated region
    $region6: #{tpu_custom_call.1} parent=1 // pred_check
      _
    $region7: #{tpu_custom_call.1} parent=1 // pred_check_branch
      %17 = sbr.rel (0) target = $region9
    $region8: #{tpu_custom_call.1} parent=1 // pred_region
      _
    $region9: #{tpu_custom_call.1} parent=1 // pred_fallthru
      _
    // Predicated region
    $region10: #{tpu_custom_call.1} parent=1 // pred_check
      _
    $region11: #{tpu_custom_call.1} parent=1 // pred_check_branch
      %19 = sbr.rel (0) target = $region13
    $region12: #{tpu_custom_call.1} parent=1 // pred_region
      _
    $region13: #{tpu_custom_call.1} parent=1 // pred_fallthru
      _
    // Predicated region
    $region14: #{tpu_custom_call.1} parent=1 // pred_check
      _
    $region15: #{tpu_custom_call.1} parent=1 // pred_check_branch
      %21 = sbr.rel (0) target = $region17
    $region16: #{tpu_custom_call.1} parent=1 // pred_region
      _
    $region17: #{tpu_custom_call.1} parent=1 // pred_fallthru
      _
    // Predicated region
    $region18: #{tpu_custom_call.1} parent=1 // pred_check
      _
    $region19: #{tpu_custom_call.1} parent=1 // pred_check_branch
      %23 = sbr.rel (0) target = $region21
    $region20: #{tpu_custom_call.1} parent=1 // pred_region
      _
    $region21: #{tpu_custom_call.1} parent=1 // pred_fallthru
      _
    // Predicated region
    $region22: #{tpu_custom_call.1} parent=1 // pred_check
      _
    $region23: #{tpu_custom_call.1} parent=1 // pred_check_branch
      %25 = sbr.rel (0) target = $region25
    $region24: #{tpu_custom_call.1} parent=1 // pred_region
      _
    $region25: #{tpu_custom_call.1} parent=1 // pred_fallthru
      _
    // Predicated region
    $region26: #{tpu_custom_call.1} parent=1 // pred_check
      _
    $region27: #{tpu_custom_call.1} parent=1 // pred_check_branch
      %27 = sbr.rel (0) target = $region29
    $region28: #{tpu_custom_call.1} parent=1 // pred_region
      _
    $region29: #{tpu_custom_call.1} parent=1 // pred_fallthru
      _
    %v28 = vld [vmem:[%s0] sm:$0xff]
    %v29 = vld [vmem:[%s0 + $0x8] sm:$0xff]
    %v30 = vld [vmem:[%s0 + $0x10] sm:$0xff]
    %v31 = vld [vmem:[%s0 + $0x18] sm:$0xff]
    %v32 = vld [vmem:[%s0 + $0x20] sm:$0xff]
    %v33 = vld [vmem:[%s0 + $0x28] sm:$0xff]
    %v34 = vld [vmem:[%s0 + $0x30] sm:$0xff]
    %v35 = vld [vmem:[%s0 + $0x38] sm:$0xff]
    %v36 = vld [vmem:[%s0 + $0x40] sm:$0xff]
    %v37 = vld [vmem:[%s0 + $0x48] sm:$0xff]
    %v38 = vld [vmem:[%s0 + $0x50] sm:$0xff]
    %v39 = vld [vmem:[%s0 + $0x58] sm:$0xff]
    %v40 = vld [vmem:[%s0 + $0x60] sm:$0xff]
    %v41 = vld [vmem:[%s0 + $0x68] sm:$0xff]
    %v42 = vld [vmem:[%s0 + $0x70] sm:$0xff]
    %v43 = vld [vmem:[%s0 + $0x78] sm:$0xff]
    %v44 = vld [vmem:[%s1] sm:$0xff]
    %v45 = vld [vmem:[%s1 + $0x8] sm:$0xff]
    %v46 = vld [vmem:[%s1 + $0x10] sm:$0xff]
    %v47 = vld [vmem:[%s1 + $0x18] sm:$0xff]
    %v48 = vld [vmem:[%s1 + $0x20] sm:$0xff]
    %v49 = vld [vmem:[%s1 + $0x28] sm:$0xff]
    %v50 = vld [vmem:[%s1 + $0x30] sm:$0xff]
    %v51 = vld [vmem:[%s1 + $0x38] sm:$0xff]
    %v52 = vld [vmem:[%s2] sm:$0xff]
    %v53 = vld [vmem:[%s2 + $0x8] sm:$0xff]
    %v54 = vld [vmem:[%s2 + $0x10] sm:$0xff]
    %v55 = vld [vmem:[%s2 + $0x18] sm:$0xff]
    %v56 = vld [vmem:[%s2 + $0x20] sm:$0xff]
    %v57 = vld [vmem:[%s2 + $0x28] sm:$0xff]
    %v58 = vld [vmem:[%s2 + $0x30] sm:$0xff]
    %v59 = vld [vmem:[%s2 + $0x38] sm:$0xff]
    %61 = vset.pattern.permute.xlu0 0
    %62 = vperm.xlu0 %61, %v52
    %v63 = vpop.permute.xlu0 %62
    %66 = vset.pattern.permute.xlu0 0
    %67 = vperm.xlu0 %66, %v53
    %v68 = vpop.permute.xlu0 %67
    %71 = vset.pattern.permute.xlu0 0
    %72 = vperm.xlu0 %71, %v54
    %v73 = vpop.permute.xlu0 %72
    %76 = vset.pattern.permute.xlu0 0
    %77 = vperm.xlu0 %76, %v55
    %v78 = vpop.permute.xlu0 %77
    %81 = vset.pattern.permute.xlu0 0
    %82 = vperm.xlu0 %81, %v56
    %v83 = vpop.permute.xlu0 %82
    %86 = vset.pattern.permute.xlu0 0
    %87 = vperm.xlu0 %86, %v57
    %v88 = vpop.permute.xlu0 %87
    %91 = vset.pattern.permute.xlu0 0
    %92 = vperm.xlu0 %91, %v58
    %v93 = vpop.permute.xlu0 %92
    %96 = vset.pattern.permute.xlu0 0
    %97 = vperm.xlu0 %96, %v59
    %v98 = vpop.permute.xlu0 %97
    %vm100 = vcmask 130048
    %v102 = vsel %vm100, %v44, 0
    %v105 = vsel %vm100, %v45, 0
    %v108 = vsel %vm100, %v46, 0
    %v111 = vsel %vm100, %v47, 0
    %v114 = vsel %vm100, %v48, 0
    %v117 = vsel %vm100, %v49, 0
    %v120 = vsel %vm100, %v50, 0
    %v123 = vsel %vm100, %v51, 0
    %v126 = vsel %vm100, %v28, 0
    %v129 = vsel %vm100, %v29, 0
    %v132 = vsel %vm100, %v30, 0
    %v135 = vsel %vm100, %v31, 0
    %v138 = vsel %vm100, %v32, 0
    %v141 = vsel %vm100, %v33, 0
    %v144 = vsel %vm100, %v34, 0
    %v147 = vsel %vm100, %v35, 0
    %v150 = vsel %vm100, %v36, 0
    %v153 = vsel %vm100, %v37, 0
    %v156 = vsel %vm100, %v38, 0
    %v159 = vsel %vm100, %v39, 0
    %v162 = vsel %vm100, %v40, 0
    %v165 = vsel %vm100, %v41, 0
    %v168 = vsel %vm100, %v42, 0
    %v171 = vsel %vm100, %v43, 0
    %173 = vmatprep.subr.mxu0 0.0
    %174 = vmatpush1.xpose.msra.mxu0 %v126
    %175 = vmatprep.subr.mxu0 0.0
    %176 = vmatpush1.xpose.msra.mxu0 %v129
    %177 = vmatprep.subr.mxu0 0.0
    %178 = vmatpush1.xpose.msra.mxu0 %v132
    %179 = vmatprep.subr.mxu0 0.0
    %180 = vmatpush1.xpose.msra.mxu0 %v135
    %181 = vmatprep.subr.mxu0 0.0
    %182 = vmatpush1.xpose.msra.mxu0 %v138
    %183 = vmatprep.subr.mxu0 0.0
    %184 = vmatpush1.xpose.msra.mxu0 %v141
    %185 = vmatprep.subr.mxu0 0.0
    %186 = vmatpush1.xpose.msra.mxu0 %v144
    %187 = vmatprep.subr.mxu0 0.0
    %188 = vmatpush1.xpose.msra.mxu0 %v147
    %189 = vmatprep.subr.mxu0 0.0
    %190 = vmatpush1.xpose.msra.mxu0 %v150
    %191 = vmatprep.subr.mxu0 0.0
    %192 = vmatpush1.xpose.msra.mxu0 %v153
    %193 = vmatprep.subr.mxu0 0.0
    %194 = vmatpush1.xpose.msra.mxu0 %v156
    %195 = vmatprep.subr.mxu0 0.0
    %196 = vmatpush1.xpose.msra.mxu0 %v159
    %197 = vmatprep.subr.mxu0 0.0
    %198 = vmatpush1.xpose.msra.mxu0 %v162
    %199 = vmatprep.subr.mxu0 0.0
    %200 = vmatpush1.xpose.msra.mxu0 %v165
    %201 = vmatprep.subr.mxu0 0.0
    %202 = vmatpush1.xpose.msra.mxu0 %v168
    %203 = vmatprep.subr.mxu0 0.0
    %204 = vmatpush1.xpose.msra.mxu0 %v171
    %205 = vmatprep.subr.mxu0 0.0
    %206 = vmatpush1.xpose.msra.mxu0 0.0
    %207 = vmatprep.subr.mxu0 0.0
    %208 = vmatpush1.xpose.msra.mxu0 0.0
    %209 = vmatprep.subr.mxu0 0.0
    %210 = vmatpush1.xpose.msra.mxu0 0.0
    %211 = vmatprep.subr.mxu0 0.0
    %212 = vmatpush1.xpose.msra.mxu0 0.0
    %213 = vmatprep.subr.mxu0 0.0
    %214 = vmatpush1.xpose.msra.mxu0 0.0
    %215 = vmatprep.subr.mxu0 0.0
    %216 = vmatpush1.xpose.msra.mxu0 0.0
    %217 = vmatprep.subr.mxu0 0.0
    %218 = vmatpush1.xpose.msra.mxu0 0.0
    %219 = vmatprep.subr.mxu0 0.0
    %220 = vmatpush1.xpose.msra.mxu0 0.0
    %221 = vmatprep.subr.mxu0 0.0
    %222 = vmatpush1.xpose.msra.mxu0 0.0
    %223 = vmatprep.subr.mxu0 0.0
    %224 = vmatpush1.xpose.msra.mxu0 0.0
    %225 = vmatprep.subr.mxu0 0.0
    %226 = vmatpush1.xpose.msra.mxu0 0.0
    %227 = vmatprep.subr.mxu0 0.0
    %228 = vmatpush1.xpose.msra.mxu0 0.0
    %229 = vmatprep.subr.mxu0 0.0
    %230 = vmatpush1.xpose.msra.mxu0 0.0
    %231 = vmatprep.subr.mxu0 0.0
    %232 = vmatpush1.xpose.msra.mxu0 0.0
    %233 = vmatprep.subr.mxu0 0.0
    %234 = vmatpush1.xpose.msra.mxu0 0.0
    %235 = vmatprep.subr.mxu0 0.0
    %236 = vmatpush1.xpose.msra.mxu0 0.0
    %237 = vmatprep.mubr.f32.mxu0 0.0
    %238 = vmatmul.mubr.f32.gmra.mrb[0].mxu0 %v102
    %v239 = vpop.f32.mrb[0].mxu0
    %v240 = vadd.f32 %v63, %v239
    %v241 = vpop.f32.mrb[0].mxu0
    %242 = vmatprep.mubr.f32.mxu0 0.0
    %243 = vmatmul.mubr.f32.gmra.mrb[0].mxu0 %v105
    %v244 = vpop.f32.mrb[0].mxu0
    %v245 = vadd.f32 %v68, %v244
    %v246 = vpop.f32.mrb[0].mxu0
    %247 = vmatprep.mubr.f32.mxu0 0.0
    %248 = vmatmul.mubr.f32.gmra.mrb[0].mxu0 %v108
    %v249 = vpop.f32.mrb[0].mxu0
    %v250 = vadd.f32 %v73, %v249
    %v251 = vpop.f32.mrb[0].mxu0
    %252 = vmatprep.mubr.f32.mxu0 0.0
    %253 = vmatmul.mubr.f32.gmra.mrb[0].mxu0 %v111
    %v254 = vpop.f32.mrb[0].mxu0
    %v255 = vadd.f32 %v78, %v254
    %v256 = vpop.f32.mrb[0].mxu0
    %257 = vmatprep.mubr.f32.mxu0 0.0
    %258 = vmatmul.mubr.f32.gmra.mrb[0].mxu0 %v114
    %v259 = vpop.f32.mrb[0].mxu0
    %v260 = vadd.f32 %v83, %v259
    %v261 = vpop.f32.mrb[0].mxu0
    %262 = vmatprep.mubr.f32.mxu0 0.0
    %263 = vmatmul.mubr.f32.gmra.mrb[0].mxu0 %v117
    %v264 = vpop.f32.mrb[0].mxu0
    %v265 = vadd.f32 %v88, %v264
    %v266 = vpop.f32.mrb[0].mxu0
    %267 = vmatprep.mubr.f32.mxu0 0.0
    %268 = vmatmul.mubr.f32.gmra.mrb[0].mxu0 %v120
    %v269 = vpop.f32.mrb[0].mxu0
    %v270 = vadd.f32 %v93, %v269
    %v271 = vpop.f32.mrb[0].mxu0
    %272 = vmatprep.mubr.f32.mxu0 0.0
    %273 = vmatmul.mubr.f32.gmra.mrb[0].mxu0 %v123
    %v274 = vpop.f32.mrb[0].mxu0
    %v275 = vadd.f32 %v98, %v274
    %v276 = vpop.f32.mrb[0].mxu0
    %277 = vdwg.mxu0
    %v278 = vmax.f32 %v240, 0.0
    %v279 = vmax.f32 %v245, 0.0
    %v280 = vmax.f32 %v250, 0.0
    %v281 = vmax.f32 %v255, 0.0
    %v282 = vmax.f32 %v260, 0.0
    %v283 = vmax.f32 %v265, 0.0
    %v284 = vmax.f32 %v270, 0.0
    %v285 = vmax.f32 %v275, 0.0
    %v286 = vld [vmem:[%s3] sm:$0xff]
    %v287 = vld [vmem:[%s3 + $0x8] sm:$0xff]
    %v288 = vld [vmem:[%s3 + $0x10] sm:$0xff]
    %v289 = vld [vmem:[%s3 + $0x18] sm:$0xff]
    %v290 = vld [vmem:[%s4] sm:$0xff]
    %v291 = vld [vmem:[%s4 + $0x8] sm:$0xff]
    %v292 = vld [vmem:[%s4 + $0x10] sm:$0xff]
    %v293 = vld [vmem:[%s4 + $0x18] sm:$0xff]
    %295 = vset.pattern.permute.xlu0 0
    %296 = vperm.xlu0 %295, %v290
    %v297 = vpop.permute.xlu0 %296
    %300 = vset.pattern.permute.xlu0 0
    %301 = vperm.xlu0 %300, %v291
    %v302 = vpop.permute.xlu0 %301
    %305 = vset.pattern.permute.xlu0 0
    %306 = vperm.xlu0 %305, %v292
    %v307 = vpop.permute.xlu0 %306
    %310 = vset.pattern.permute.xlu0 0
    %311 = vperm.xlu0 %310, %v293
    %v312 = vpop.permute.xlu0 %311
    %vm314 = vcmask 523264
    %v316 = vsel %vm314, %v286, 0
    %v319 = vsel %vm314, %v287, 0
    %v322 = vsel %vm314, %v288, 0
    %v325 = vsel %vm314, %v289, 0
    %327 = vmatprep.subr.mxu0 0.0
    %328 = vmatpush1.msra.mxu0 %v278
    %329 = vmatprep.subr.mxu0 0.0
    %330 = vmatpush1.msra.mxu0 %v279
    %331 = vmatprep.subr.mxu0 0.0
    %332 = vmatpush1.msra.mxu0 %v280
    %333 = vmatprep.subr.mxu0 0.0
    %334 = vmatpush1.msra.mxu0 %v281
    %335 = vmatprep.subr.mxu0 0.0
    %336 = vmatpush1.msra.mxu0 %v282
    %337 = vmatprep.subr.mxu0 0.0
    %338 = vmatpush1.msra.mxu0 %v283
    %339 = vmatprep.subr.mxu0 0.0
    %340 = vmatpush1.msra.mxu0 %v284
    %341 = vmatprep.subr.mxu0 0.0
    %342 = vmatpush1.msra.mxu0 %v285
    %343 = vmatprep.subr.mxu0 0.0
    %344 = vmatpush1.msra.mxu0 0.0
    %345 = vmatprep.subr.mxu0 0.0
    %346 = vmatpush1.msra.mxu0 0.0
    %347 = vmatprep.subr.mxu0 0.0
    %348 = vmatpush1.msra.mxu0 0.0
    %349 = vmatprep.subr.mxu0 0.0
    %350 = vmatpush1.msra.mxu0 0.0
    %351 = vmatprep.subr.mxu0 0.0
    %352 = vmatpush1.msra.mxu0 0.0
    %353 = vmatprep.subr.mxu0 0.0
    %354 = vmatpush1.msra.mxu0 0.0
    %355 = vmatprep.subr.mxu0 0.0
    %356 = vmatpush1.msra.mxu0 0.0
    %357 = vmatprep.subr.mxu0 0.0
    %358 = vmatpush1.msra.mxu0 0.0
    %359 = vmatprep.subr.mxu0 0.0
    %360 = vmatpush1.msra.mxu0 0.0
    %361 = vmatprep.subr.mxu0 0.0
    %362 = vmatpush1.msra.mxu0 0.0
    %363 = vmatprep.subr.mxu0 0.0
    %364 = vmatpush1.msra.mxu0 0.0
    %365 = vmatprep.subr.mxu0 0.0
    %366 = vmatpush1.msra.mxu0 0.0
    %367 = vmatprep.subr.mxu0 0.0
    %368 = vmatpush1.msra.mxu0 0.0
    %369 = vmatprep.subr.mxu0 0.0
    %370 = vmatpush1.msra.mxu0 0.0
    %371 = vmatprep.subr.mxu0 0.0
    %372 = vmatpush1.msra.mxu0 0.0
    %373 = vmatprep.subr.mxu0 0.0
    %374 = vmatpush1.msra.mxu0 0.0
    %375 = vmatprep.subr.mxu0 0.0
    %376 = vmatpush1.msra.mxu0 0.0
    %377 = vmatprep.subr.mxu0 0.0
    %378 = vmatpush1.msra.mxu0 0.0
    %379 = vmatprep.subr.mxu0 0.0
    %380 = vmatpush1.msra.mxu0 0.0
    %381 = vmatprep.subr.mxu0 0.0
    %382 = vmatpush1.msra.mxu0 0.0
    %383 = vmatprep.subr.mxu0 0.0
    %384 = vmatpush1.msra.mxu0 0.0
    %385 = vmatprep.subr.mxu0 0.0
    %386 = vmatpush1.msra.mxu0 0.0
    %387 = vmatprep.subr.mxu0 0.0
    %388 = vmatpush1.msra.mxu0 0.0
    %389 = vmatprep.subr.mxu0 0.0
    %390 = vmatpush1.msra.mxu0 0.0
    %391 = vmatprep.mubr.f32.mxu0 0.0
    %392 = vmatmul.mubr.f32.gmra.mrb[0].mxu0 %v316
    %v393 = vpop.f32.mrb[0].mxu0
    %v394 = vadd.f32 %v297, %v393
    %v395 = vpop.f32.mrb[0].mxu0
    %396 = vmatprep.mubr.f32.mxu0 0.0
    %397 = vmatmul.mubr.f32.gmra.mrb[0].mxu0 %v319
    %v398 = vpop.f32.mrb[0].mxu0
    %v399 = vadd.f32 %v302, %v398
    %v400 = vpop.f32.mrb[0].mxu0
    %401 = vmatprep.mubr.f32.mxu0 0.0
    %402 = vmatmul.mubr.f32.gmra.mrb[0].mxu0 %v322
    %v403 = vpop.f32.mrb[0].mxu0
    %v404 = vadd.f32 %v307, %v403
    %v405 = vpop.f32.mrb[0].mxu0
    %406 = vmatprep.mubr.f32.mxu0 0.0
    %407 = vmatmul.mubr.f32.gmra.mrb[0].mxu0 %v325
    %v408 = vpop.f32.mrb[0].mxu0
    %v409 = vadd.f32 %v312, %v408
    %v410 = vpop.f32.mrb[0].mxu0
    %411 = vdwg.mxu0
    %v412 = vmax.f32 %v394, 0.0
    %v413 = vmax.f32 %v399, 0.0
    %v414 = vmax.f32 %v404, 0.0
    %v415 = vmax.f32 %v409, 0.0
    %v416 = vld [vmem:[%s5] sm:$0xff]
    %v417 = vld [vmem:[%s5 + $0x8] sm:$0xff]
    %v418 = vld [vmem:[%s5 + $0x10] sm:$0xff]
    %v419 = vld [vmem:[%s5 + $0x18] sm:$0xff]
    %421 = vset.pattern.permute.xlu0 0
    %422 = vperm.xlu0 %421, %v416
    %v423 = vpop.permute.xlu0 %422
    %426 = vset.pattern.permute.xlu0 0
    %427 = vperm.xlu0 %426, %v417
    %v428 = vpop.permute.xlu0 %427
    %431 = vset.pattern.permute.xlu0 0
    %432 = vperm.xlu0 %431, %v418
    %v433 = vpop.permute.xlu0 %432
    %436 = vset.pattern.permute.xlu0 0
    %437 = vperm.xlu0 %436, %v419
    %v438 = vpop.permute.xlu0 %437
    %v440 = vmul.f32 %v412, %v423
    %v441 = vmul.f32 %v413, %v428
    %v442 = vmul.f32 %v414, %v433
    %v443 = vmul.f32 %v415, %v438
    %v444 = vadd.f32 %v440, %v441
    %v445 = vadd.f32 %v444, %v442
    %v446 = vadd.f32 %v445, %v443
    %v447 = vrot.slane %v446, 4
    %v448 = vadd.f32 %v446, %v447
    %v449 = vrot.slane %v448, 2
    %v450 = vadd.f32 %v448, %v449
    %v451 = vrot.slane %v450, 1
    %v452 = vadd.f32 %v450, %v451
    %s453 = sld [smem:[#allocation2]]
    %v454 = vstv %s453
    %v455 = vadd.f32 %v452, %v454
    %456 = vst [vmem:[#allocation3] sm:$0x1] %v455
    // Predicated region
    $region30: #{tpu_custom_call.1} parent=1 // pred_check
      _
    $region31: #{tpu_custom_call.1} parent=1 // pred_check_branch
      %458 = sbr.rel (0) target = $region33
    $region32: #{tpu_custom_call.1} parent=1 // pred_region
      %s460 = ssub.s32 16, 16
      %461 = vsyncadd [#allocation4], %s460
      %s463 = sshll.u32 [#allocation3], 4
      %s464 = int_to_ptr.vmem [resolvable:$true] %s463
      %466 = dma.vmem_to_hbm [thread:$0]  %s464, 16, %s7, [#allocation4]
    $region33: #{tpu_custom_call.1} parent=1 // pred_fallthru
      _
    // Predicated region
    $region34: #{tpu_custom_call.1} parent=1 // pred_check
      _
    $region35: #{tpu_custom_call.1} parent=1 // pred_check_branch
      %468 = sbr.rel (0) target = $region37
    $region36: #{tpu_custom_call.1} parent=1 // pred_region
      %469 = dma.done [#allocation4], 16
    $region37: #{tpu_custom_call.1} parent=1 // pred_fallthru
      _
    %470 = vsyncpa [#allocation4], 1

</llo_original>
